<compile_context>
chip_gen: v7x
topology: tpu7x:2x2x1
jax: 0.10.0
libtpu: 0.0.40
codegen_flags: <defaults>
</compile_context>

<pallas_src>
import functools

import jax
import jax.numpy as jnp
from jax import lax
from jax.experimental import pallas as pl
from jax.experimental.pallas import tpu as pltpu

_LOG2E = 1.4426950408889634


def _round_up(x, m):
    return ((x + m - 1) // m) * m


def _pad2(a, rows, cols):
    r, c = a.shape
    if r == rows and c == cols:
        return a
    return jnp.pad(a, ((0, rows - r), (0, cols - c)))


def _pick_tile(requested, n_p):
    """Largest multiple of 128 that divides n_p and is <= requested (min 128)."""
    best = 128
    t = 256
    while t <= min(requested, n_p):
        if n_p % t == 0:
            best = t
        t += 128
    return best


# ----------------------------------------------------------------------------
# Kernel 1: fused QKV projection.  One wide matmul against [Wq*scale | Wk | Wv];
# emits the concatenated (tile, 3*d_out_p) block in compute_dtype (bf16).
# ----------------------------------------------------------------------------
def qkv_proj_kernel(x_ref, w_ref, b_ref, qkv_ref):
    qkv = jnp.dot(x_ref[...], w_ref[...], preferred_element_type=jnp.float32)
    qkv_ref[...] = (qkv + b_ref[...]).astype(qkv_ref.dtype)


# ----------------------------------------------------------------------------
# Kernel 2: flash-style attention, online softmax over the kv grid axis.
# Scores live in the log2 domain (log2(e)/sqrt(N) pre-folded into Wq) -> exp2.
# The f32 output block is resident across the kv axis and used as the accumulator.
# ----------------------------------------------------------------------------
def flash_attn_kernel(q_ref, k_ref, v_ref, o_ref, m_sc, l_sc,
                      *, n_valid, tk, need_mask):
    kv = pl.program_id(1)

    @pl.when(kv == 0)
    def _init():
        m_sc[...] = jnp.full_like(m_sc, -jnp.inf)
        l_sc[...] = jnp.zeros_like(l_sc)
        o_ref[...] = jnp.zeros_like(o_ref)

    # (TQ, TK) scores: bf16 operands, f32 MXU accumulation, contract the feature
    # axes directly -- no materialized transpose.
    s = lax.dot_general(q_ref[...], k_ref[...], (((1,), (1,)), ((), ())),
                        preferred_element_type=jnp.float32)

    if need_mask:
        # Trailing key padding is < 128 <= tk, so only the last kv tile actually
        # has invalid columns; the predicate is trivially true elsewhere.
        col = lax.broadcasted_iota(jnp.int32, s.shape, 1) + kv * tk
        s = jnp.where(col < n_valid, s, -1e30)

    m_prev = m_sc[...]
    m_new = jnp.maximum(m_prev, jnp.max(s, axis=1, keepdims=True))
    alpha = jnp.exp2(m_prev - m_new)            # EUP
    p = jnp.exp2(s - m_new)                     # EUP
    l_sc[...] = alpha * l_sc[...] + jnp.sum(p, axis=1, keepdims=True)
    o_ref[...] = alpha * o_ref[...] + jnp.dot(
        p.astype(v_ref.dtype), v_ref[...], preferred_element_type=jnp.float32)
    m_sc[...] = m_new

    @pl.when(kv == pl.num_programs(1) - 1)
    def _finalize():
        # Exact division (the previous approx reciprocal caused the 1.4e-3 error).
        o_ref[...] = o_ref[...] / l_sc[...]


# ----------------------------------------------------------------------------
# Wrapper
# ----------------------------------------------------------------------------
def attention_pallas(x, wq, bq, wk, bk, wv, bv, *, tq=512, tk=256,
                     compute_dtype=jnp.bfloat16):
    x = jnp.asarray(x, jnp.float32)
    n, d_in = x.shape
    d_out = wq.shape[1]
    bq, bk, bv = (jnp.asarray(b, jnp.float32).reshape(1, -1) for b in (bq, bk, bv))

    # PyTorch module scales by K.shape[0] == N (sequence length), NOT d_k.
    # log2(e) is folded in as well so the online softmax can use exp2 directly.
    scale = _LOG2E / (float(n) ** 0.5)

    # Lane-dense / (8,128)-friendly padded shapes.
    n_p = _round_up(n, 128)
    d_in_p = _round_up(d_in, 128)
    d_out_p = _round_up(d_out, 128)

    # Tiles: multiples of 128 that divide the padded sequence.
    tq = _pick_tile(tq, n_p)
    tk = _pick_tile(tk, n_p)
    # Keep >= 2 q-tiles when possible so the "parallel" axis can use both v7x TCs.
    if n_p // tq < 2 and n_p >= 256:
        tq = _pick_tile(n_p // 2, n_p)

    x_p = _pad2(x, n_p, d_in_p)
    # Fused weight/bias: [Wq*scale | Wk | Wv] -> one wide MXU matmul for Q/K/V.
    w_cat = jnp.concatenate([_pad2(wq * scale, d_in_p, d_out_p),
                             _pad2(wk, d_in_p, d_out_p),
                             _pad2(wv, d_in_p, d_out_p)], axis=1)
    b_cat = jnp.concatenate([_pad2(bq * scale, 1, d_out_p),
                             _pad2(bk, 1, d_out_p),
                             _pad2(bv, 1, d_out_p)], axis=1)

    # ---- Kernel 1: fused QKV projection (emits bf16 by default). ----
    qkv = pl.pallas_call(
        qkv_proj_kernel,
        out_shape=jax.ShapeDtypeStruct((n_p, 3 * d_out_p), compute_dtype),
        grid=(n_p // tq,),
        in_specs=[
            pl.BlockSpec((tq, d_in_p), lambda i: (i, 0)),
            pl.BlockSpec((d_in_p, 3 * d_out_p), lambda i: (0, 0)),
            pl.BlockSpec((1, 3 * d_out_p), lambda i: (0, 0)),
        ],
        out_specs=pl.BlockSpec((tq, 3 * d_out_p), lambda i: (i, 0)),
        compiler_params=pltpu.CompilerParams(dimension_semantics=("parallel",)),
    )(x_p, w_cat, b_cat)

    # ---- Kernel 2: flash attention; Q/K/V are column-block slices of `qkv`. ----
    need_mask = n_p != n
    itemsize = jnp.dtype(compute_dtype).itemsize
    n_q_tiles = n_p // tq
    cost = pl.CostEstimate(
        flops=4 * n_p * n_p * d_out_p,                           # QK^T + PV
        transcendentals=n_p * n_p,                               # exp2 of scores
        bytes_accessed=(n_p * d_out_p * itemsize                 # Q
                        + 2 * n_q_tiles * n_p * d_out_p * itemsize  # K,V per q pass
                        + n_p * d_out_p * 4))                    # f32 output

    out_p = pl.pallas_call(
        functools.partial(flash_attn_kernel, n_valid=n, tk=tk, need_mask=need_mask),
        out_shape=jax.ShapeDtypeStruct((n_p, d_out_p), jnp.float32),
        grid=(n_p // tq, n_p // tk),
        in_specs=[
            pl.BlockSpec((tq, d_out_p), lambda qi, ki: (qi, 0)),   # Q columns
            pl.BlockSpec((tk, d_out_p), lambda qi, ki: (ki, 1)),   # K columns
            pl.BlockSpec((tk, d_out_p), lambda qi, ki: (ki, 2)),   # V columns
        ],
        out_specs=pl.BlockSpec((tq, d_out_p), lambda qi, ki: (qi, 0)),
        scratch_shapes=[
            pltpu.VMEM((tq, 1), jnp.float32),   # running max (log2 domain)
            pltpu.VMEM((tq, 1), jnp.float32),   # running sum
        ],
        compiler_params=pltpu.CompilerParams(
            dimension_semantics=("parallel", "arbitrary"),
            vmem_limit_bytes=32 * 1024 * 1024),
        cost_estimate=cost,
    )(qkv, qkv, qkv)

    return out_p[:n, :d_out]


def attention_ref(x, wq, bq, wk, bk, wv, bv):
    q = x @ wq + bq
    k = x @ wk + bk
    v = x @ wv + bv
    n = x.shape[0]
    s = (q @ k.T) / (n ** 0.5)
    p = jax.nn.softmax(s, axis=1)
    return p @ v


if __name__ == "__main__":
    # Small shapes consistent with the module's forward: x is (seq, in_feat).
    N, IN_FEAT, OUT_FEAT = 8, 32, 32

    key = jax.random.PRNGKey(0)
    kx, kq, kbq, kk, kbk, kvv, kbv = jax.random.split(key, 7)

    x = jax.random.normal(kx, (N, IN_FEAT), dtype=jnp.float32)
    # nn.Linear(in_feat, out_feat) parameters, stored pre-transposed as (in, out).
    wq = jax.random.normal(kq, (IN_FEAT, OUT_FEAT), dtype=jnp.float32) * 0.1
    bq = jax.random.normal(kbq, (OUT_FEAT,), dtype=jnp.float32) * 0.1
    wk = jax.random.normal(kk, (IN_FEAT, OUT_FEAT), dtype=jnp.float32) * 0.1
    bk = jax.random.normal(kbk, (OUT_FEAT,), dtype=jnp.float32) * 0.1
    wv = jax.random.normal(kvv, (IN_FEAT, OUT_FEAT), dtype=jnp.float32) * 0.1
    bv = jax.random.normal(kbv, (OUT_FEAT,), dtype=jnp.float32) * 0.1

    ref = attention_ref(x, wq, bq, wk, bk, wv, bv)

    # f32 path: validates the flash/online-softmax algorithm at tight tolerance.
    out_f32 = jax.block_until_ready(
        attention_pallas(x, wq, bq, wk, bk, wv, bv, compute_dtype=jnp.float32))
    assert out_f32.shape == (N, OUT_FEAT)
    err32 = jnp.max(jnp.abs(out_f32 - ref))
    assert jnp.allclose(out_f32, ref, atol=1e-4, rtol=1e-4), (
        f"f32 path mismatch vs reference: max_abs_err={err32}")

    # bf16 path (performance default): bf16 MXU operands with f32 accumulation;
    # tolerance reflects bf16 operand rounding (~8-bit mantissa).
    out = jax.block_until_ready(attention_pallas(x, wq, bq, wk, bk, wv, bv))
    assert out.shape == (N, OUT_FEAT)
    err16 = jnp.max(jnp.abs(out - ref))
    assert jnp.allclose(out, ref, atol=2e-2, rtol=2e-2), (
        f"bf16 path mismatch vs reference: max_abs_err={err16}")

    print("KERNEL_OK")
</pallas_src>

<mosaic_0001>
module attributes {stable_mosaic.version = 11 : i64} {
  func.func @qkv_proj_kernel(%arg0: i32, %arg1: memref<128x128xf32, #tpu.memory_space<vmem>>, %arg2: memref<128x384xf32, #tpu.memory_space<vmem>>, %arg3: memref<1x384xf32, #tpu.memory_space<vmem>>, %arg4: memref<128x384xf32, #tpu.memory_space<vmem>>) attributes {dimension_semantics = [#tpu.dimension_semantics<parallel>], iteration_bounds = array<i64: 1>, scalar_prefetch = 0 : i64, scratch_operands = 0 : i64, tpu.core_type = #tpu.core_type<tc>, window_params = [{transform_indices = @transform_0, window_bounds = array<i64: 128, 128>}, {pipeline_mode = #tpu.pipeline_mode<synchronous>, transform_indices = @transform_1, window_bounds = array<i64: 128, 384>}, {pipeline_mode = #tpu.pipeline_mode<synchronous>, transform_indices = @transform_2, window_bounds = array<i64: 1, 384>}, {transform_indices = @transform_3, window_bounds = array<i64: 128, 384>}]} {
    %c0 = arith.constant 0 : index
    %c0_0 = arith.constant 0 : index
    %0 = vector.load %arg1[%c0, %c0_0] : memref<128x128xf32, #tpu.memory_space<vmem>>, vector<128x128xf32>
    %c0_1 = arith.constant 0 : index
    %c0_2 = arith.constant 0 : index
    %1 = vector.load %arg2[%c0_1, %c0_2] : memref<128x384xf32, #tpu.memory_space<vmem>>, vector<128x384xf32>
    %cst = arith.constant dense<0.000000e+00> : vector<128x384xf32>
    %2 = tpu.matmul %0, %1, %cst {dimension_numbers = #tpu.dot_dimension_numbers<[1], [0], [0], [1], [0, 0, 1, 1], [], []>} : vector<128x128xf32>, vector<128x384xf32>, vector<128x384xf32> -> vector<128x384xf32>
    %c0_3 = arith.constant 0 : index
    %c0_4 = arith.constant 0 : index
    %3 = vector.load %arg3[%c0_3, %c0_4] : memref<1x384xf32, #tpu.memory_space<vmem>>, vector<1x384xf32>
    %4 = vector.broadcast %3 : vector<1x384xf32> to vector<128x384xf32>
    %5 = arith.addf %2, %4 : vector<128x384xf32>
    %c0_5 = arith.constant 0 : index
    %c0_6 = arith.constant 0 : index
    %6 = vector.load %arg4[%c0_5, %c0_6] : memref<128x384xf32, #tpu.memory_space<vmem>>, vector<128x384xf32>
    tpu.vector_store %arg4[%c0_5, %c0_6], %5 {strides = array<i32>} : memref<128x384xf32, #tpu.memory_space<vmem>>, vector<128x384xf32>,
    return
  }
  func.func @transform_0(%arg0: i32) -> (i32, i32) {
    %c0_i32 = arith.constant 0 : i32
    %c0_i32_0 = arith.constant 0 : i32
    return %arg0, %c0_i32 : i32, i32
  }
  func.func @transform_1(%arg0: i32) -> (i32, i32) {
    %c0_i32 = arith.constant 0 : i32
    %c0_i32_0 = arith.constant 0 : i32
    %c0_i32_1 = arith.constant 0 : i32
    return %c0_i32, %c0_i32_0 : i32, i32
  }
  func.func @transform_2(%arg0: i32) -> (i32, i32) {
    %c0_i32 = arith.constant 0 : i32
    %c0_i32_0 = arith.constant 0 : i32
    %c0_i32_1 = arith.constant 0 : i32
    return %c0_i32, %c0_i32_0 : i32, i32
  }
  func.func @transform_3(%arg0: i32) -> (i32, i32) {
    %c0_i32 = arith.constant 0 : i32
    %c0_i32_0 = arith.constant 0 : i32
    return %arg0, %c0_i32 : i32, i32
  }
}

</mosaic_0001>

<llo_original>
// kernel: tpu_custom_call.1
$region0: #{tpu_custom_call.1}
  #allocation0 [shape = 'u32[]', space=smem, size = 0x4, offset = 0x4, fixed_abs, tag = 'smem constant byte address 0x4 - core index']
  #allocation1 [shape = 'u32[144,128]{1,0:T(1,128)}', space=vmem, size = 0x12000, scoped, tag = 'internal scratch']
  %s0 = inlined_call_operand.hbm [shape: f32[128,128], index: 0, kind: input, shape index: {}]
  %s1 = inlined_call_operand.hbm [shape: f32[128,384], index: 1, kind: input, shape index: {}]
  %s2 = inlined_call_operand.vmem [shape: f32[1,384], index: 2, kind: input, shape index: {}]
  %s3 = inlined_call_operand.hbm [shape: f32[128,384], index: 3, kind: output, shape index: {}]
  %s4 = sld [smem:[#allocation0]]
  $region30: #{tpu_custom_call.1} parent=0
    _
  %s6 = ssub.s32 1, %s4
  %s7 = scalar_select 0, %s6, %s4
  $region1: #{tpu_custom_call.1} parent=0
    #allocation2 [shape = 'u8[65536]{0}', space=vmem, size = 0x10000, scoped, tag = 'input window, operand 0, single buffered']
    #allocation3 [shape = 's32[1]{0}', space=sflag, size = 0x4, scoped, tag = 'scoped memory for tpu_custom_call.1']
    #allocation4 [shape = 's32[1]{0}', space=sflag, size = 0x4, scoped, tag = 'scoped memory for tpu_custom_call.1']
    #allocation5 [shape = 'u8[196608]{0}', space=vmem, size = 0x30000, scoped, tag = 'input window, operand 1, single buffered']
    #allocation6 [shape = 's32[1]{0}', space=sflag, size = 0x4, scoped, tag = 'scoped memory for tpu_custom_call.1']
    #allocation7 [shape = 'u8[196608]{0}', space=vmem, size = 0x30000, scoped, tag = 'output window, operand 0, single buffered']
    %8 = vsyncpa [#allocation3], 0
    %9 = vsyncpa [#allocation6], 0
    %10 = vsyncpa [#allocation4], 0
    // Predicated region
    $region2: #{tpu_custom_call.1} parent=1 // pred_check
      _
    $region3: #{tpu_custom_call.1} parent=1 // pred_check_branch
      %12 = sbr.rel (0) target = $region5
    $region4: #{tpu_custom_call.1} parent=1 // pred_region
      %s14 = ssub.s32 2048, 2048
      %15 = vsyncadd [#allocation3], %s14
      %s16 = sshll.u32 [#allocation2], 4
      %s17 = int_to_ptr.vmem [resolvable:$true] %s16
      %22 = dma.hbm_to_vmem [thread:$0]  %s0, 2048, %s17, [#allocation3], 128, 128, 8
    $region5: #{tpu_custom_call.1} parent=1 // pred_fallthru
      _
    // Predicated region
    $region6: #{tpu_custom_call.1} parent=1 // pred_check
      _
    $region7: #{tpu_custom_call.1} parent=1 // pred_check_branch
      %24 = sbr.rel (0) target = $region9
    $region8: #{tpu_custom_call.1} parent=1 // pred_region
      %s26 = ssub.s32 6144, 6144
      %27 = vsyncadd [#allocation6], %s26
      %s28 = sshll.u32 [#allocation5], 4
      %s29 = int_to_ptr.vmem [resolvable:$true] %s28
      %34 = dma.hbm_to_vmem [thread:$0]  %s1, 6144, %s29, [#allocation6], 384, 384, 24
    $region9: #{tpu_custom_call.1} parent=1 // pred_fallthru
      _
    // Predicated region
    $region10: #{tpu_custom_call.1} parent=1 // pred_check
      _
    $region11: #{tpu_custom_call.1} parent=1 // pred_check_branch
      %36 = sbr.rel (0) target = $region13
    $region12: #{tpu_custom_call.1} parent=1 // pred_region
      _
    $region13: #{tpu_custom_call.1} parent=1 // pred_fallthru
      _
    // Predicated region
    $region14: #{tpu_custom_call.1} parent=1 // pred_check
      _
    $region15: #{tpu_custom_call.1} parent=1 // pred_check_branch
      %38 = sbr.rel (0) target = $region17
    $region16: #{tpu_custom_call.1} parent=1 // pred_region
      %39 = dma.done [#allocation3], 2048
    $region17: #{tpu_custom_call.1} parent=1 // pred_fallthru
      _
    // Predicated region
    $region18: #{tpu_custom_call.1} parent=1 // pred_check
      _
    $region19: #{tpu_custom_call.1} parent=1 // pred_check_branch
      %41 = sbr.rel (0) target = $region21
    $region20: #{tpu_custom_call.1} parent=1 // pred_region
      %42 = dma.done [#allocation6], 6144
    $region21: #{tpu_custom_call.1} parent=1 // pred_fallthru
      _
    %v43 = vld [vmem:[#allocation2] sm:$0xff]
    %v44 = vld [vmem:[#allocation2 + $0x8] sm:$0xff]
    %v45 = vld [vmem:[#allocation2 + $0x10] sm:$0xff]
    %v46 = vld [vmem:[#allocation2 + $0x18] sm:$0xff]
    %v47 = vld [vmem:[#allocation2 + $0x20] sm:$0xff]
    %v48 = vld [vmem:[#allocation2 + $0x28] sm:$0xff]
    %v49 = vld [vmem:[#allocation2 + $0x30] sm:$0xff]
    %v50 = vld [vmem:[#allocation2 + $0x38] sm:$0xff]
    %v51 = vld [vmem:[#allocation2 + $0x40] sm:$0xff]
    %v52 = vld [vmem:[#allocation2 + $0x48] sm:$0xff]
    %v53 = vld [vmem:[#allocation2 + $0x50] sm:$0xff]
    %v54 = vld [vmem:[#allocation2 + $0x58] sm:$0xff]
    %v55 = vld [vmem:[#allocation2 + $0x60] sm:$0xff]
    %v56 = vld [vmem:[#allocation2 + $0x68] sm:$0xff]
    %v57 = vld [vmem:[#allocation2 + $0x70] sm:$0xff]
    %v58 = vld [vmem:[#allocation2 + $0x78] sm:$0xff]
    %v59 = vld [vmem:[#allocation5] sm:$0xff]
    %v60 = vld [vmem:[#allocation5 + $0x8] sm:$0xff]
    %v61 = vld [vmem:[#allocation5 + $0x10] sm:$0xff]
    %v62 = vld [vmem:[#allocation5 + $0x18] sm:$0xff]
    %v63 = vld [vmem:[#allocation5 + $0x20] sm:$0xff]
    %v64 = vld [vmem:[#allocation5 + $0x28] sm:$0xff]
    %v65 = vld [vmem:[#allocation5 + $0x30] sm:$0xff]
    %v66 = vld [vmem:[#allocation5 + $0x38] sm:$0xff]
    %v67 = vld [vmem:[#allocation5 + $0x40] sm:$0xff]
    %v68 = vld [vmem:[#allocation5 + $0x48] sm:$0xff]
    %v69 = vld [vmem:[#allocation5 + $0x50] sm:$0xff]
    %v70 = vld [vmem:[#allocation5 + $0x58] sm:$0xff]
    %v71 = vld [vmem:[#allocation5 + $0x60] sm:$0xff]
    %v72 = vld [vmem:[#allocation5 + $0x68] sm:$0xff]
    %v73 = vld [vmem:[#allocation5 + $0x70] sm:$0xff]
    %v74 = vld [vmem:[#allocation5 + $0x78] sm:$0xff]
    %v75 = vld [vmem:[#allocation5 + $0x80] sm:$0xff]
    %v76 = vld [vmem:[#allocation5 + $0x88] sm:$0xff]
    %v77 = vld [vmem:[#allocation5 + $0x90] sm:$0xff]
    %v78 = vld [vmem:[#allocation5 + $0x98] sm:$0xff]
    %v79 = vld [vmem:[#allocation5 + $0xa0] sm:$0xff]
    %v80 = vld [vmem:[#allocation5 + $0xa8] sm:$0xff]
    %v81 = vld [vmem:[#allocation5 + $0xb0] sm:$0xff]
    %v82 = vld [vmem:[#allocation5 + $0xb8] sm:$0xff]
    %v83 = vld [vmem:[#allocation5 + $0xc0] sm:$0xff]
    %v84 = vld [vmem:[#allocation5 + $0xc8] sm:$0xff]
    %v85 = vld [vmem:[#allocation5 + $0xd0] sm:$0xff]
    %v86 = vld [vmem:[#allocation5 + $0xd8] sm:$0xff]
    %v87 = vld [vmem:[#allocation5 + $0xe0] sm:$0xff]
    %v88 = vld [vmem:[#allocation5 + $0xe8] sm:$0xff]
    %v89 = vld [vmem:[#allocation5 + $0xf0] sm:$0xff]
    %v90 = vld [vmem:[#allocation5 + $0xf8] sm:$0xff]
    %v91 = vld [vmem:[#allocation5 + $0x100] sm:$0xff]
    %v92 = vld [vmem:[#allocation5 + $0x108] sm:$0xff]
    %v93 = vld [vmem:[#allocation5 + $0x110] sm:$0xff]
    %v94 = vld [vmem:[#allocation5 + $0x118] sm:$0xff]
    %v95 = vld [vmem:[#allocation5 + $0x120] sm:$0xff]
    %v96 = vld [vmem:[#allocation5 + $0x128] sm:$0xff]
    %v97 = vld [vmem:[#allocation5 + $0x130] sm:$0xff]
    %v98 = vld [vmem:[#allocation5 + $0x138] sm:$0xff]
    %v99 = vld [vmem:[#allocation5 + $0x140] sm:$0xff]
    %v100 = vld [vmem:[#allocation5 + $0x148] sm:$0xff]
    %v101 = vld [vmem:[#allocation5 + $0x150] sm:$0xff]
    %v102 = vld [vmem:[#allocation5 + $0x158] sm:$0xff]
    %v103 = vld [vmem:[#allocation5 + $0x160] sm:$0xff]
    %v104 = vld [vmem:[#allocation5 + $0x168] sm:$0xff]
    %v105 = vld [vmem:[#allocation5 + $0x170] sm:$0xff]
    %v106 = vld [vmem:[#allocation5 + $0x178] sm:$0xff]
    %v107 = vld [vmem:[%s2] sm:$0x7]
    %v109 = vlaneseq
    %v110 = vshrl.u32 %v109, 7
    %v111 = vsub.s32 0, %v110
    %v112 = vrot.slane %v107, %v111
    %v113 = vlaneseq
    %v114 = vshrl.u32 %v113, 7
    %v115 = vsub.s32 1, %v114
    %v116 = vrot.slane %v107, %v115
    %v117 = vlaneseq
    %v118 = vshrl.u32 %v117, 7
    %v119 = vsub.s32 2, %v118
    %v120 = vrot.slane %v107, %v119
    %124 = vmatprep.subr.mxu0 %v60
    %125 = vmatpush1.msra.mxu0 %v59
    %126 = vmatprep.subr.mxu0 %v63
    %127 = vmatpush1.msra.mxu0 %v62
    %128 = vmatprep.subr.mxu0 %v66
    %129 = vmatpush1.msra.mxu0 %v65
    %130 = vmatprep.subr.mxu0 %v69
    %131 = vmatpush1.msra.mxu0 %v68
    %132 = vmatprep.subr.mxu0 %v72
    %133 = vmatpush1.msra.mxu0 %v71
    %134 = vmatprep.subr.mxu0 %v75
    %135 = vmatpush1.msra.mxu0 %v74
    %136 = vmatprep.subr.mxu0 %v78
    %137 = vmatpush1.msra.mxu0 %v77
    %138 = vmatprep.subr.mxu0 %v81
    %139 = vmatpush1.msra.mxu0 %v80
    %140 = vmatprep.subr.mxu0 %v84
    %141 = vmatpush1.msra.mxu0 %v83
    %142 = vmatprep.subr.mxu0 %v87
    %143 = vmatpush1.msra.mxu0 %v86
    %144 = vmatprep.subr.mxu0 %v90
    %145 = vmatpush1.msra.mxu0 %v89
    %146 = vmatprep.subr.mxu0 %v93
    %147 = vmatpush1.msra.mxu0 %v92
    %148 = vmatprep.subr.mxu0 %v96
    %149 = vmatpush1.msra.mxu0 %v95
    %150 = vmatprep.subr.mxu0 %v99
    %151 = vmatpush1.msra.mxu0 %v98
    %152 = vmatprep.subr.mxu0 %v102
    %153 = vmatpush1.msra.mxu0 %v101
    %154 = vmatprep.subr.mxu0 %v105
    %155 = vmatpush1.msra.mxu0 %v104
    %156 = vmatprep.subr.mxu0 0.0
    %157 = vmatpush1.msra.mxu0 0.0
    %158 = vmatprep.subr.mxu0 0.0
    %159 = vmatpush1.msra.mxu0 0.0
    %160 = vmatprep.subr.mxu0 0.0
    %161 = vmatpush1.msra.mxu0 0.0
    %162 = vmatprep.subr.mxu0 0.0
    %163 = vmatpush1.msra.mxu0 0.0
    %164 = vmatprep.subr.mxu0 0.0
    %165 = vmatpush1.msra.mxu0 0.0
    %166 = vmatprep.subr.mxu0 0.0
    %167 = vmatpush1.msra.mxu0 0.0
    %168 = vmatprep.subr.mxu0 0.0
    %169 = vmatpush1.msra.mxu0 0.0
    %170 = vmatprep.subr.mxu0 0.0
    %171 = vmatpush1.msra.mxu0 0.0
    %172 = vmatprep.subr.mxu0 0.0
    %173 = vmatpush1.msra.mxu0 0.0
    %174 = vmatprep.subr.mxu0 0.0
    %175 = vmatpush1.msra.mxu0 0.0
    %176 = vmatprep.subr.mxu0 0.0
    %177 = vmatpush1.msra.mxu0 0.0
    %178 = vmatprep.subr.mxu0 0.0
    %179 = vmatpush1.msra.mxu0 0.0
    %180 = vmatprep.subr.mxu0 0.0
    %181 = vmatpush1.msra.mxu0 0.0
    %182 = vmatprep.subr.mxu0 0.0
    %183 = vmatpush1.msra.mxu0 0.0
    %184 = vmatprep.subr.mxu0 0.0
    %185 = vmatpush1.msra.mxu0 0.0
    %186 = vmatprep.subr.mxu0 0.0
    %187 = vmatpush1.msra.mxu0 0.0
    %188 = vmatprep.mubr.f32.mxu0 0.0
    %189 = vmatmul.mubr.f32.gmra.mrb[0].mxu0 %v43
    %v190 = vpop.f32.mrb[0].mxu0
    %v191 = vadd.f32 %v112, %v190
    %v192 = vpop.f32.mrb[0].mxu0
    %v193 = vadd.f32 %v116, %v192
    %194 = vmatprep.mubr.f32.mxu0 0.0
    %195 = vmatmul.mubr.f32.gmra.mrb[0].mxu0 %v44
    %v196 = vpop.f32.mrb[0].mxu0
    %v197 = vadd.f32 %v112, %v196
    %v198 = vpop.f32.mrb[0].mxu0
    %v199 = vadd.f32 %v116, %v198
    %200 = vmatprep.mubr.f32.mxu0 0.0
    %201 = vmatmul.mubr.f32.gmra.mrb[0].mxu0 %v45
    %v202 = vpop.f32.mrb[0].mxu0
    %v203 = vadd.f32 %v112, %v202
    %v204 = vpop.f32.mrb[0].mxu0
    %v205 = vadd.f32 %v116, %v204
    %206 = vmatprep.mubr.f32.mxu0 0.0
    %207 = vmatmul.mubr.f32.gmra.mrb[0].mxu0 %v46
    %v208 = vpop.f32.mrb[0].mxu0
    %v209 = vadd.f32 %v112, %v208
    %v210 = vpop.f32.mrb[0].mxu0
    %v211 = vadd.f32 %v116, %v210
    %212 = vmatprep.mubr.f32.mxu0 0.0
    %213 = vmatmul.mubr.f32.gmra.mrb[0].mxu0 %v47
    %v214 = vpop.f32.mrb[0].mxu0
    %v215 = vadd.f32 %v112, %v214
    %v216 = vpop.f32.mrb[0].mxu0
    %v217 = vadd.f32 %v116, %v216
    %218 = vmatprep.mubr.f32.mxu0 0.0
    %219 = vmatmul.mubr.f32.gmra.mrb[0].mxu0 %v48
    %v220 = vpop.f32.mrb[0].mxu0
    %v221 = vadd.f32 %v112, %v220
    %v222 = vpop.f32.mrb[0].mxu0
    %v223 = vadd.f32 %v116, %v222
    %224 = vmatprep.mubr.f32.mxu0 0.0
    %225 = vmatmul.mubr.f32.gmra.mrb[0].mxu0 %v49
    %v226 = vpop.f32.mrb[0].mxu0
    %v227 = vadd.f32 %v112, %v226
    %v228 = vpop.f32.mrb[0].mxu0
    %v229 = vadd.f32 %v116, %v228
    %230 = vmatprep.mubr.f32.mxu0 0.0
    %231 = vmatmul.mubr.f32.gmra.mrb[0].mxu0 %v50
    %v232 = vpop.f32.mrb[0].mxu0
    %v233 = vadd.f32 %v112, %v232
    %v234 = vpop.f32.mrb[0].mxu0
    %v235 = vadd.f32 %v116, %v234
    %236 = vmatprep.mubr.f32.mxu0 0.0
    %237 = vmatmul.mubr.f32.gmra.mrb[0].mxu0 %v51
    %v238 = vpop.f32.mrb[0].mxu0
    %v239 = vadd.f32 %v112, %v238
    %v240 = vpop.f32.mrb[0].mxu0
    %v241 = vadd.f32 %v116, %v240
    %242 = vmatprep.mubr.f32.mxu0 0.0
    %243 = vmatmul.mubr.f32.gmra.mrb[0].mxu0 %v52
    %v244 = vpop.f32.mrb[0].mxu0
    %v245 = vadd.f32 %v112, %v244
    %v246 = vpop.f32.mrb[0].mxu0
    %v247 = vadd.f32 %v116, %v246
    %248 = vmatprep.mubr.f32.mxu0 0.0
    %249 = vmatmul.mubr.f32.gmra.mrb[0].mxu0 %v53
    %v250 = vpop.f32.mrb[0].mxu0
    %v251 = vadd.f32 %v112, %v250
    %v252 = vpop.f32.mrb[0].mxu0
    %v253 = vadd.f32 %v116, %v252
    %254 = vmatprep.mubr.f32.mxu0 0.0
    %255 = vmatmul.mubr.f32.gmra.mrb[0].mxu0 %v54
    %v256 = vpop.f32.mrb[0].mxu0
    %v257 = vadd.f32 %v112, %v256
    %v258 = vpop.f32.mrb[0].mxu0
    %v259 = vadd.f32 %v116, %v258
    %260 = vmatprep.mubr.f32.mxu0 0.0
    %261 = vmatmul.mubr.f32.gmra.mrb[0].mxu0 %v55
    %v262 = vpop.f32.mrb[0].mxu0
    %v263 = vadd.f32 %v112, %v262
    %v264 = vpop.f32.mrb[0].mxu0
    %v265 = vadd.f32 %v116, %v264
    %266 = vmatprep.mubr.f32.mxu0 0.0
    %267 = vmatmul.mubr.f32.gmra.mrb[0].mxu0 %v56
    %v268 = vpop.f32.mrb[0].mxu0
    %v269 = vadd.f32 %v112, %v268
    %v270 = vpop.f32.mrb[0].mxu0
    %v271 = vadd.f32 %v116, %v270
    %272 = vmatprep.mubr.f32.mxu0 0.0
    %273 = vmatmul.mubr.f32.gmra.mrb[0].mxu0 %v57
    %v274 = vpop.f32.mrb[0].mxu0
    %v275 = vadd.f32 %v112, %v274
    %v276 = vpop.f32.mrb[0].mxu0
    %v277 = vadd.f32 %v116, %v276
    %278 = vmatprep.mubr.f32.mxu0 0.0
    %279 = vmatmul.mubr.f32.gmra.mrb[0].mxu0 %v58
    %v280 = vpop.f32.mrb[0].mxu0
    %v281 = vadd.f32 %v112, %v280
    %v282 = vpop.f32.mrb[0].mxu0
    %v283 = vadd.f32 %v116, %v282
    %284 = vdwg.mxu0
    %285 = vmatprep.subr.mxu0 0.0
    %286 = vmatpush1.msra.mxu0 %v61
    %287 = vmatprep.subr.mxu0 0.0
    %288 = vmatpush1.msra.mxu0 %v64
    %289 = vmatprep.subr.mxu0 0.0
    %290 = vmatpush1.msra.mxu0 %v67
    %291 = vmatprep.subr.mxu0 0.0
    %292 = vmatpush1.msra.mxu0 %v70
    %293 = vmatprep.subr.mxu0 0.0
    %294 = vmatpush1.msra.mxu0 %v73
    %295 = vmatprep.subr.mxu0 0.0
    %296 = vmatpush1.msra.mxu0 %v76
    %297 = vmatprep.subr.mxu0 0.0
    %298 = vmatpush1.msra.mxu0 %v79
    %299 = vmatprep.subr.mxu0 0.0
    %300 = vmatpush1.msra.mxu0 %v82
    %301 = vmatprep.subr.mxu0 0.0
    %302 = vmatpush1.msra.mxu0 %v85
    %303 = vmatprep.subr.mxu0 0.0
    %304 = vmatpush1.msra.mxu0 %v88
    %305 = vmatprep.subr.mxu0 0.0
    %306 = vmatpush1.msra.mxu0 %v91
    %307 = vmatprep.subr.mxu0 0.0
    %308 = vmatpush1.msra.mxu0 %v94
    %309 = vmatprep.subr.mxu0 0.0
    %310 = vmatpush1.msra.mxu0 %v97
    %311 = vmatprep.subr.mxu0 0.0
    %312 = vmatpush1.msra.mxu0 %v100
    %313 = vmatprep.subr.mxu0 0.0
    %314 = vmatpush1.msra.mxu0 %v103
    %315 = vmatprep.subr.mxu0 0.0
    %316 = vmatpush1.msra.mxu0 %v106
    %317 = vmatprep.subr.mxu0 0.0
    %318 = vmatpush1.msra.mxu0 0.0
    %319 = vmatprep.subr.mxu0 0.0
    %320 = vmatpush1.msra.mxu0 0.0
    %321 = vmatprep.subr.mxu0 0.0
    %322 = vmatpush1.msra.mxu0 0.0
    %323 = vmatprep.subr.mxu0 0.0
    %324 = vmatpush1.msra.mxu0 0.0
    %325 = vmatprep.subr.mxu0 0.0
    %326 = vmatpush1.msra.mxu0 0.0
    %327 = vmatprep.subr.mxu0 0.0
    %328 = vmatpush1.msra.mxu0 0.0
    %329 = vmatprep.subr.mxu0 0.0
    %330 = vmatpush1.msra.mxu0 0.0
    %331 = vmatprep.subr.mxu0 0.0
    %332 = vmatpush1.msra.mxu0 0.0
    %333 = vmatprep.subr.mxu0 0.0
    %334 = vmatpush1.msra.mxu0 0.0
    %335 = vmatprep.subr.mxu0 0.0
    %336 = vmatpush1.msra.mxu0 0.0
    %337 = vmatprep.subr.mxu0 0.0
    %338 = vmatpush1.msra.mxu0 0.0
    %339 = vmatprep.subr.mxu0 0.0
    %340 = vmatpush1.msra.mxu0 0.0
    %341 = vmatprep.subr.mxu0 0.0
    %342 = vmatpush1.msra.mxu0 0.0
    %343 = vmatprep.subr.mxu0 0.0
    %344 = vmatpush1.msra.mxu0 0.0
    %345 = vmatprep.subr.mxu0 0.0
    %346 = vmatpush1.msra.mxu0 0.0
    %347 = vmatprep.subr.mxu0 0.0
    %348 = vmatpush1.msra.mxu0 0.0
    %349 = vmatprep.mubr.f32.mxu0 0.0
    %350 = vmatmul.mubr.f32.gmra.mrb[0].mxu0 %v43
    %v351 = vpop.f32.mrb[0].mxu0
    %v352 = vadd.f32 %v120, %v351
    %v353 = vpop.f32.mrb[0].mxu0
    %354 = vmatprep.mubr.f32.mxu0 0.0
    %355 = vmatmul.mubr.f32.gmra.mrb[0].mxu0 %v44
    %v356 = vpop.f32.mrb[0].mxu0
    %v357 = vadd.f32 %v120, %v356
    %v358 = vpop.f32.mrb[0].mxu0
    %359 = vmatprep.mubr.f32.mxu0 0.0
    %360 = vmatmul.mubr.f32.gmra.mrb[0].mxu0 %v45
    %v361 = vpop.f32.mrb[0].mxu0
    %v362 = vadd.f32 %v120, %v361
    %v363 = vpop.f32.mrb[0].mxu0
    %364 = vmatprep.mubr.f32.mxu0 0.0
    %365 = vmatmul.mubr.f32.gmra.mrb[0].mxu0 %v46
    %v366 = vpop.f32.mrb[0].mxu0
    %v367 = vadd.f32 %v120, %v366
    %v368 = vpop.f32.mrb[0].mxu0
    %369 = vmatprep.mubr.f32.mxu0 0.0
    %370 = vmatmul.mubr.f32.gmra.mrb[0].mxu0 %v47
    %v371 = vpop.f32.mrb[0].mxu0
    %v372 = vadd.f32 %v120, %v371
    %v373 = vpop.f32.mrb[0].mxu0
    %374 = vmatprep.mubr.f32.mxu0 0.0
    %375 = vmatmul.mubr.f32.gmra.mrb[0].mxu0 %v48
    %v376 = vpop.f32.mrb[0].mxu0
    %v377 = vadd.f32 %v120, %v376
    %v378 = vpop.f32.mrb[0].mxu0
    %379 = vmatprep.mubr.f32.mxu0 0.0
    %380 = vmatmul.mubr.f32.gmra.mrb[0].mxu0 %v49
    %v381 = vpop.f32.mrb[0].mxu0
    %v382 = vadd.f32 %v120, %v381
    %v383 = vpop.f32.mrb[0].mxu0
    %384 = vmatprep.mubr.f32.mxu0 0.0
    %385 = vmatmul.mubr.f32.gmra.mrb[0].mxu0 %v50
    %v386 = vpop.f32.mrb[0].mxu0
    %v387 = vadd.f32 %v120, %v386
    %v388 = vpop.f32.mrb[0].mxu0
    %389 = vmatprep.mubr.f32.mxu0 0.0
    %390 = vmatmul.mubr.f32.gmra.mrb[0].mxu0 %v51
    %v391 = vpop.f32.mrb[0].mxu0
    %v392 = vadd.f32 %v120, %v391
    %v393 = vpop.f32.mrb[0].mxu0
    %394 = vmatprep.mubr.f32.mxu0 0.0
    %395 = vmatmul.mubr.f32.gmra.mrb[0].mxu0 %v52
    %v396 = vpop.f32.mrb[0].mxu0
    %v397 = vadd.f32 %v120, %v396
    %v398 = vpop.f32.mrb[0].mxu0
    %399 = vmatprep.mubr.f32.mxu0 0.0
    %400 = vmatmul.mubr.f32.gmra.mrb[0].mxu0 %v53
    %v401 = vpop.f32.mrb[0].mxu0
    %v402 = vadd.f32 %v120, %v401
    %v403 = vpop.f32.mrb[0].mxu0
    %404 = vmatprep.mubr.f32.mxu0 0.0
    %405 = vmatmul.mubr.f32.gmra.mrb[0].mxu0 %v54
    %v406 = vpop.f32.mrb[0].mxu0
    %v407 = vadd.f32 %v120, %v406
    %v408 = vpop.f32.mrb[0].mxu0
    %409 = vmatprep.mubr.f32.mxu0 0.0
    %410 = vmatmul.mubr.f32.gmra.mrb[0].mxu0 %v55
    %v411 = vpop.f32.mrb[0].mxu0
    %v412 = vadd.f32 %v120, %v411
    %v413 = vpop.f32.mrb[0].mxu0
    %414 = vmatprep.mubr.f32.mxu0 0.0
    %415 = vmatmul.mubr.f32.gmra.mrb[0].mxu0 %v56
    %v416 = vpop.f32.mrb[0].mxu0
    %v417 = vadd.f32 %v120, %v416
    %v418 = vpop.f32.mrb[0].mxu0
    %419 = vmatprep.mubr.f32.mxu0 0.0
    %420 = vmatmul.mubr.f32.gmra.mrb[0].mxu0 %v57
    %v421 = vpop.f32.mrb[0].mxu0
    %v422 = vadd.f32 %v120, %v421
    %v423 = vpop.f32.mrb[0].mxu0
    %424 = vmatprep.mubr.f32.mxu0 0.0
    %425 = vmatmul.mubr.f32.gmra.mrb[0].mxu0 %v58
    %v426 = vpop.f32.mrb[0].mxu0
    %v427 = vadd.f32 %v120, %v426
    %v428 = vpop.f32.mrb[0].mxu0
    %429 = vdwg.mxu0
    %430 = vst [vmem:[#allocation7] sm:$0xff] %v191
    %431 = vst [vmem:[#allocation7 + $0x8] sm:$0xff] %v193
    %432 = vst [vmem:[#allocation7 + $0x10] sm:$0xff] %v352
    %433 = vst [vmem:[#allocation7 + $0x18] sm:$0xff] %v197
    %434 = vst [vmem:[#allocation7 + $0x20] sm:$0xff] %v199
    %435 = vst [vmem:[#allocation7 + $0x28] sm:$0xff] %v357
    %436 = vst [vmem:[#allocation7 + $0x30] sm:$0xff] %v203
    %437 = vst [vmem:[#allocation7 + $0x38] sm:$0xff] %v205
    %438 = vst [vmem:[#allocation7 + $0x40] sm:$0xff] %v362
    %439 = vst [vmem:[#allocation7 + $0x48] sm:$0xff] %v209
    %440 = vst [vmem:[#allocation7 + $0x50] sm:$0xff] %v211
    %441 = vst [vmem:[#allocation7 + $0x58] sm:$0xff] %v367
    %442 = vst [vmem:[#allocation7 + $0x60] sm:$0xff] %v215
    %443 = vst [vmem:[#allocation7 + $0x68] sm:$0xff] %v217
    %444 = vst [vmem:[#allocation7 + $0x70] sm:$0xff] %v372
    %445 = vst [vmem:[#allocation7 + $0x78] sm:$0xff] %v221
    %446 = vst [vmem:[#allocation7 + $0x80] sm:$0xff] %v223
    %447 = vst [vmem:[#allocation7 + $0x88] sm:$0xff] %v377
    %448 = vst [vmem:[#allocation7 + $0x90] sm:$0xff] %v227
    %449 = vst [vmem:[#allocation7 + $0x98] sm:$0xff] %v229
    %450 = vst [vmem:[#allocation7 + $0xa0] sm:$0xff] %v382
    %451 = vst [vmem:[#allocation7 + $0xa8] sm:$0xff] %v233
    %452 = vst [vmem:[#allocation7 + $0xb0] sm:$0xff] %v235
    %453 = vst [vmem:[#allocation7 + $0xb8] sm:$0xff] %v387
    %454 = vst [vmem:[#allocation7 + $0xc0] sm:$0xff] %v239
    %455 = vst [vmem:[#allocation7 + $0xc8] sm:$0xff] %v241
    %456 = vst [vmem:[#allocation7 + $0xd0] sm:$0xff] %v392
    %457 = vst [vmem:[#allocation7 + $0xd8] sm:$0xff] %v245
    %458 = vst [vmem:[#allocation7 + $0xe0] sm:$0xff] %v247
    %459 = vst [vmem:[#allocation7 + $0xe8] sm:$0xff] %v397
    %460 = vst [vmem:[#allocation7 + $0xf0] sm:$0xff] %v251
    %461 = vst [vmem:[#allocation7 + $0xf8] sm:$0xff] %v253
    %462 = vst [vmem:[#allocation7 + $0x100] sm:$0xff] %v402
    %463 = vst [vmem:[#allocation7 + $0x108] sm:$0xff] %v257
    %464 = vst [vmem:[#allocation7 + $0x110] sm:$0xff] %v259
    %465 = vst [vmem:[#allocation7 + $0x118] sm:$0xff] %v407
    %466 = vst [vmem:[#allocation7 + $0x120] sm:$0xff] %v263
    %467 = vst [vmem:[#allocation7 + $0x128] sm:$0xff] %v265
    %468 = vst [vmem:[#allocation7 + $0x130] sm:$0xff] %v412
    %469 = vst [vmem:[#allocation7 + $0x138] sm:$0xff] %v269
    %470 = vst [vmem:[#allocation7 + $0x140] sm:$0xff] %v271
    %471 = vst [vmem:[#allocation7 + $0x148] sm:$0xff] %v417
    %472 = vst [vmem:[#allocation7 + $0x150] sm:$0xff] %v275
    %473 = vst [vmem:[#allocation7 + $0x158] sm:$0xff] %v277
    %474 = vst [vmem:[#allocation7 + $0x160] sm:$0xff] %v422
    %475 = vst [vmem:[#allocation7 + $0x168] sm:$0xff] %v281
    %476 = vst [vmem:[#allocation7 + $0x170] sm:$0xff] %v283
    %477 = vst [vmem:[#allocation7 + $0x178] sm:$0xff] %v427
    // Predicated region
    $region22: #{tpu_custom_call.1} parent=1 // pred_check
      _
    $region23: #{tpu_custom_call.1} parent=1 // pred_check_branch
      %479 = sbr.rel (0) target = $region25
    $region24: #{tpu_custom_call.1} parent=1 // pred_region
      %s481 = ssub.s32 6144, 6144
      %482 = vsyncadd [#allocation4], %s481
      %s483 = sshll.u32 [#allocation7], 4
      %s484 = int_to_ptr.vmem [resolvable:$true] %s483
      %489 = dma.vmem_to_hbm [thread:$0]  %s484, 6144, %s3, [#allocation4], 384, 384, 24
    $region25: #{tpu_custom_call.1} parent=1 // pred_fallthru
      _
    // Predicated region
    $region26: #{tpu_custom_call.1} parent=1 // pred_check
      _
    $region27: #{tpu_custom_call.1} parent=1 // pred_check_branch
      %491 = sbr.rel (0) target = $region29
    $region28: #{tpu_custom_call.1} parent=1 // pred_region
      %492 = dma.done [#allocation4], 6144
    $region29: #{tpu_custom_call.1} parent=1 // pred_fallthru
      _
    %493 = vsyncpa [#allocation3], 1
    %494 = vsyncpa [#allocation6], 1
    %495 = vsyncpa [#allocation4], 1

</llo_original>
